<compile_context>
chip_gen: v5e
topology: v5e:2x2
jax: 0.10.0
libtpu: 0.0.40
codegen_flags: <defaults>
</compile_context>

<pallas_src>
import functools

import jax
import jax.numpy as jnp
from jax.experimental import pallas as pl
from jax.experimental.pallas import tpu as pltpu

LANES = 128            # vreg lane width (fast axis)
TILE_ROWS = 1024       # 1024 x 128 x 4 B = 512 KiB per f32 block


def _round_up(a, b):
    return ((a + b - 1) // b) * b


def _linear_kernel(x_ref, w_ref, b_ref, o_ref):
    # x_ref: (tile_rows, 128) VMEM tile; w_ref / b_ref: (1,) SMEM scalars.
    w = w_ref[0]                     # scalar weight W[0, 0]
    b = b_ref[0]                     # scalar bias   b[0]
    o_ref[...] = x_ref[...] * w + b  # broadcasted VPU multiply-add


@functools.partial(jax.jit, static_argnames=("tile_rows",))
def linear_regression_forward(x, weight, bias, *, tile_rows=TILE_ROWS):
    """Pallas equivalent of nn.Linear(1, 1).forward(x).

    Args:
      x:      (N, 1) float32
      weight: (1, 1) float32  (out_features, in_features) — PyTorch convention
      bias:   (1,)   float32
    Returns:
      (N, 1) float32
    """
    n = x.shape[0]
    dtype = x.dtype

    # Lane-dense repack: (N, 1) -> (rows_padded, 128).
    rows = pl.cdiv(n, LANES)
    tr = tile_rows if rows >= tile_rows else _round_up(rows, 8)  # sublane-aligned tile
    rows_padded = _round_up(rows, tr)
    total_padded = rows_padded * LANES

    flat = x.reshape(-1)
    if total_padded != n:  # pad only when the shape actually requires it
        flat = jnp.pad(flat, (0, total_padded - n))
    x2d = flat.reshape(rows_padded, LANES)

    grid = (rows_padded // tr,)

    out2d = pl.pallas_call(
        _linear_kernel,
        out_shape=jax.ShapeDtypeStruct((rows_padded, LANES), dtype),
        grid_spec=pltpu.PrefetchScalarGridSpec(
            num_scalar_prefetch=0,
            grid=grid,
            in_specs=[
                pl.BlockSpec((tr, LANES), lambda i: (i, 0)),          # lane-dense x tile
                pl.BlockSpec(memory_space=pltpu.MemorySpace.SMEM),    # weight scalar
                pl.BlockSpec(memory_space=pltpu.MemorySpace.SMEM),    # bias scalar
            ],
            out_specs=pl.BlockSpec((tr, LANES), lambda i: (i, 0)),
        ),
        compiler_params=pltpu.CompilerParams(
            dimension_semantics=("parallel",),   # lets v7x shard rows across its 2 TCs
        ),
    )(x2d, weight.reshape(-1), bias.reshape(-1))

    # Drop the padded tail (no-op slice when nothing was padded) and restore (N, 1).
    return out2d.reshape(-1)[:n].reshape(n, 1)


if __name__ == "__main__":
    key = jax.random.PRNGKey(0)
    kx, kw, kb, kx2, kx3 = jax.random.split(key, 5)

    # Deterministic parameter init (shapes from nn.Linear(1, 1)):
    weight = jax.random.uniform(kw, (1, 1), jnp.float32, -1.0, 1.0)  # (out=1, in=1)
    bias = jax.random.uniform(kb, (1,), jnp.float32, -1.0, 1.0)      # (1,)

    # Small example input: batch of 8 scalar features.
    x = jax.random.normal(kx, (8, 1), jnp.float32)
    out = jax.block_until_ready(linear_regression_forward(x, weight, bias))
    ref = x @ weight.T + bias
    assert out.shape == (8, 1)
    assert jnp.allclose(out, ref, atol=1e-6), (out, ref)

    # Multi-tile grid + padded-tail path.
    x_big = jax.random.normal(kx2, (3000, 1), jnp.float32)
    out_big = jax.block_until_ready(
        linear_regression_forward(x_big, weight, bias, tile_rows=8))
    ref_big = x_big @ weight.T + bias
    assert out_big.shape == (3000, 1)
    assert jnp.allclose(out_big, ref_big, atol=1e-6)

    # Exactly-aligned path (no padding, no tail slice copy).
    x_aligned = jax.random.normal(kx3, (LANES * 16, 1), jnp.float32)
    out_aligned = jax.block_until_ready(
        linear_regression_forward(x_aligned, weight, bias, tile_rows=8))
    ref_aligned = x_aligned @ weight.T + bias
    assert out_aligned.shape == (LANES * 16, 1)
    assert jnp.allclose(out_aligned, ref_aligned, atol=1e-6)

    print("KERNEL_OK")
</pallas_src>

<mosaic_0001>
module attributes {stable_mosaic.version = 11 : i64} {
  func.func @_linear_kernel(%arg0: i32, %arg1: memref<8x128xf32, #tpu.memory_space<vmem>>, %arg2: memref<1xf32, #tpu.memory_space<smem>>, %arg3: memref<1xf32, #tpu.memory_space<smem>>, %arg4: memref<8x128xf32, #tpu.memory_space<vmem>>) attributes {dimension_semantics = [#tpu.dimension_semantics<parallel>], iteration_bounds = array<i64: 1>, scalar_prefetch = 0 : i64, scratch_operands = 0 : i64, tpu.core_type = #tpu.core_type<tc>, window_params = [{transform_indices = @transform_0, window_bounds = array<i64: 8, 128>}, {transform_indices = @transform_1, window_bounds = array<i64: 1>}, {transform_indices = @transform_2, window_bounds = array<i64: 1>}, {transform_indices = @transform_3, window_bounds = array<i64: 8, 128>}]} {
    %c0 = arith.constant 0 : index
    %0 = memref.load %arg2[%c0] : memref<1xf32, #tpu.memory_space<smem>>
    %c0_0 = arith.constant 0 : index
    %1 = memref.load %arg3[%c0_0] : memref<1xf32, #tpu.memory_space<smem>>
    %c0_1 = arith.constant 0 : index
    %c0_2 = arith.constant 0 : index
    %2 = vector.load %arg1[%c0_1, %c0_2] : memref<8x128xf32, #tpu.memory_space<vmem>>, vector<8x128xf32>
    %3 = vector.broadcast %0 : f32 to vector<8x128xf32>
    %4 = arith.mulf %2, %3 : vector<8x128xf32>
    %5 = vector.broadcast %1 : f32 to vector<8x128xf32>
    %6 = arith.addf %4, %5 : vector<8x128xf32>
    %c0_3 = arith.constant 0 : index
    %c0_4 = arith.constant 0 : index
    %7 = vector.load %arg4[%c0_3, %c0_4] : memref<8x128xf32, #tpu.memory_space<vmem>>, vector<8x128xf32>
    tpu.vector_store %arg4[%c0_3, %c0_4], %6 {strides = array<i32>} : memref<8x128xf32, #tpu.memory_space<vmem>>, vector<8x128xf32>,
    return
  }
  func.func @transform_0(%arg0: i32) -> (i32, i32) {
    %c0_i32 = arith.constant 0 : i32
    %c0_i32_0 = arith.constant 0 : i32
    return %arg0, %c0_i32 : i32, i32
  }
  func.func @transform_1(%arg0: i32) -> i32 {
    %c0_i32 = arith.constant 0 : i32
    %c0_i32_0 = arith.constant 0 : i32
    return %c0_i32 : i32
  }
  func.func @transform_2(%arg0: i32) -> i32 {
    %c0_i32 = arith.constant 0 : i32
    %c0_i32_0 = arith.constant 0 : i32
    return %c0_i32 : i32
  }
  func.func @transform_3(%arg0: i32) -> (i32, i32) {
    %c0_i32 = arith.constant 0 : i32
    %c0_i32_0 = arith.constant 0 : i32
    return %arg0, %c0_i32 : i32, i32
  }
}

</mosaic_0001>

<llo_original>
// kernel: linear_regression_forward.1
$region0: #{linear_regression_forward.1}
  #allocation0 [shape = 'u32[]', space=smem, size = 0x4, offset = 0x4, fixed_abs, tag = 'smem constant byte address 0x4 - core index']
  #allocation1 [shape = 'u32[72,128]{1,0:T(1,128)}', space=vmem, size = 0x9000, scoped, tag = 'internal scratch']
  #allocation2 [shape = 'f32[1]{0:T(128)S(6)}', space=smem, size = 0x200, scoped, tag = 'scoped memory for linear_regression_forward.1']
  #allocation3 [shape = 'f32[1]{0:T(128)S(6)}', space=smem, size = 0x200, scoped, tag = 'scoped memory for linear_regression_forward.1']
  %s0 = inlined_call_operand.vmem [shape: f32[8,128], index: 0, kind: input, shape index: {}]
  %s1 = inlined_call_operand.<no memory space> [shape: f32[1], index: 1, kind: input, shape index: {}]
  %s2 = inlined_call_operand.<no memory space> [shape: f32[1], index: 2, kind: input, shape index: {}]
  %s3 = inlined_call_operand.vmem [shape: f32[8,128], index: 3, kind: output, shape index: {}]
  %s4 = sld [smem:[#allocation0]]
  $region22: #{linear_regression_forward.1} parent=0
    _
  %s6 = ssub.s32 1, %s4
  %s7 = scalar_select 0, %s6, %s4
  %8 = sst [smem:[#allocation2]] %s1
  %9 = sst [smem:[#allocation3]] %s2
  // Predicated region
  $region2: #{linear_regression_forward.1} parent=0 // pred_check
    _
  $region3: #{linear_regression_forward.1} parent=0 // pred_check_branch
    %11 = sbr.rel (0) target = $region5
  $region4: #{linear_regression_forward.1} parent=0 // pred_region
    _
  $region5: #{linear_regression_forward.1} parent=0 // pred_fallthru
    _
  // Predicated region
  $region6: #{linear_regression_forward.1} parent=0 // pred_check
    _
  $region7: #{linear_regression_forward.1} parent=0 // pred_check_branch
    %13 = sbr.rel (0) target = $region9
  $region8: #{linear_regression_forward.1} parent=0 // pred_region
    _
  $region9: #{linear_regression_forward.1} parent=0 // pred_fallthru
    _
  // Predicated region
  $region10: #{linear_regression_forward.1} parent=0 // pred_check
    _
  $region11: #{linear_regression_forward.1} parent=0 // pred_check_branch
    %15 = sbr.rel (0) target = $region13
  $region12: #{linear_regression_forward.1} parent=0 // pred_region
    _
  $region13: #{linear_regression_forward.1} parent=0 // pred_fallthru
    _
  %s16 = sld [smem:[#allocation2]]
  %s17 = sld [smem:[#allocation3]]
  %v18 = vld [vmem:[%s0] sm:$0xff]
  %v19 = vstv %s16
  %v20 = vmul.f32 %v18, %v19
  %v21 = vstv %s17
  %v22 = vadd.f32 %v20, %v21
  %23 = vst [vmem:[%s3] sm:$0xff] %v22
  // Predicated region
  $region14: #{linear_regression_forward.1} parent=0 // pred_check
    _
  $region15: #{linear_regression_forward.1} parent=0 // pred_check_branch
    %25 = sbr.rel (0) target = $region17
  $region16: #{linear_regression_forward.1} parent=0 // pred_region
    _
  $region17: #{linear_regression_forward.1} parent=0 // pred_fallthru
    _
  // Predicated region
  $region18: #{linear_regression_forward.1} parent=0 // pred_check
    _
  $region19: #{linear_regression_forward.1} parent=0 // pred_check_branch
    %27 = sbr.rel (0) target = $region21
  $region20: #{linear_regression_forward.1} parent=0 // pred_region
    _
  $region21: #{linear_regression_forward.1} parent=0 // pred_fallthru
    _

</llo_original>
